<compile_context>
chip_gen: v7x
topology: tpu7x:2x2x1
jax: 0.10.0
libtpu: 0.0.40
codegen_flags: <defaults>
</compile_context>

<pallas_src>
import jax
import jax.numpy as jnp
from jax.experimental import pallas as pl
from jax.experimental.pallas import tpu as pltpu

NUM_FEATURES = 32                      # `num_features` from the module
NUM_CLASSES = 2
DIMS = [NUM_FEATURES, 200, 400, 100, 10, NUM_CLASSES]
NEG_SLOPE = 0.2                        # F.leaky_relu(..., 0.2)

LANE = 128
GRIDLESS_MAX_B = 1024                  # single gridless call below this
TILE_B_MAX = 2048                      # per-step batch tile cap (v5e VMEM headroom)
OUT_DTYPE = jnp.bfloat16               # lane-dense bf16 output stream


def _round_up(n, m):
    return ((n + m - 1) // m) * m


# Layer widths as seen by the kernel: input keeps its true 32 features; hidden
# and output widths are lane-aligned so every matmul / store is full-lane.
PAD_DIMS = [NUM_FEATURES] + [_round_up(d, LANE) for d in DIMS[1:]]
# -> [32, 256, 512, 128, 128, 128]


# ----------------------------------------------------------------------------
# Kernel
# ----------------------------------------------------------------------------
def mlp_kernel(x_ref,
               w1_ref, b1_ref, w2_ref, b2_ref, w3_ref, b3_ref,
               w4_ref, b4_ref, w5_ref, b5_ref,
               out_ref):
    def layer(h_bf16, w_ref, b_ref):
        # bf16 x bf16 -> f32 accumulate on the MXU, then f32 elementwise.
        y = jnp.dot(h_bf16, w_ref[...],
                    preferred_element_type=jnp.float32) + b_ref[...]
        y = jnp.where(y >= 0, y, NEG_SLOPE * y)       # leaky_relu (f32 VPU)
        return y.astype(jnp.bfloat16)                  # dropout -> identity

    # In-kernel bf16 cast of the raw f32 input (no wrapper pad/cast pass).
    h = x_ref[...].astype(jnp.bfloat16)
    h = layer(h, w1_ref, b1_ref)
    h = layer(h, w2_ref, b2_ref)
    h = layer(h, w3_ref, b3_ref)
    h = layer(h, w4_ref, b4_ref)

    logits = jnp.dot(h, w5_ref[...],
                     preferred_element_type=jnp.float32) + b5_ref[...]

    # Mask padded output lanes (finite large-negative, NOT -inf) so the
    # log_softmax only sees the real 2 classes.
    lane = jax.lax.broadcasted_iota(jnp.int32, logits.shape, dimension=1)
    logits = jnp.where(lane < NUM_CLASSES, logits,
                       jnp.full_like(logits, -1e30))

    # Numerically stable log_softmax over dim=1.
    m = jnp.max(logits, axis=-1, keepdims=True)
    z = logits - m
    lse = jnp.log(jnp.sum(jnp.exp(z), axis=-1, keepdims=True))
    out_ref[...] = (z - lse).astype(out_ref.dtype)


# ----------------------------------------------------------------------------
# Parameters
# ----------------------------------------------------------------------------
def init_params(key):
    """PyTorch-style init U(-1/sqrt(fan_in), 1/sqrt(fan_in)), stored [in, out]."""
    params = []
    for i in range(len(DIMS) - 1):
        fan_in, fan_out = DIMS[i], DIMS[i + 1]
        key, kw, kb = jax.random.split(key, 3)
        bound = 1.0 / jnp.sqrt(jnp.float32(fan_in))
        w = jax.random.uniform(kw, (fan_in, fan_out), jnp.float32, -bound, bound)
        b = jax.random.uniform(kb, (1, fan_out), jnp.float32, -bound, bound)
        params.append((w, b))
    return params


def prep_params(params):
    """Zero-pad to kernel widths; weights bf16, biases f32."""
    prepped = []
    for (w, b), din_p, dout_p in zip(params, PAD_DIMS[:-1], PAD_DIMS[1:]):
        din, dout = w.shape
        w_p = jnp.zeros((din_p, dout_p), jnp.bfloat16)
        w_p = w_p.at[:din, :dout].set(w.astype(jnp.bfloat16))
        b_p = jnp.zeros((1, dout_p), jnp.float32)
        b_p = b_p.at[:, :dout].set(b)
        prepped.append((w_p, b_p))
    return prepped


def _cost_estimate(n_rows, flat):
    flops = 2 * n_rows * sum(din * dout
                             for din, dout in zip(PAD_DIMS[:-1], PAD_DIMS[1:]))
    bytes_accessed = (n_rows * NUM_FEATURES * 4
                      + sum(int(a.size) * a.dtype.itemsize for a in flat)
                      + n_rows * PAD_DIMS[-1] * jnp.dtype(OUT_DTYPE).itemsize)
    return pl.CostEstimate(flops=flops,
                           transcendentals=n_rows * (PAD_DIMS[-1] + 1),
                           bytes_accessed=bytes_accessed)


# ----------------------------------------------------------------------------
# Wrapper
# ----------------------------------------------------------------------------
def net_forward(x, params_p):
    xf = x.reshape(-1, NUM_FEATURES)            # x.view(-1, num_features)
    B = xf.shape[0]
    OUT_PAD = PAD_DIMS[-1]

    flat = []
    for w, b in params_p:
        flat.extend([w, b])

    if B <= GRIDLESS_MAX_B:
        # Small/medium batch: single gridless call, whole arrays as VMEM refs,
        # no pipeline prologue/epilogue, no double-buffered weight copies.
        Bp = _round_up(max(B, 8), 8)
        if Bp != B:
            xf = jnp.pad(xf, ((0, Bp - B), (0, 0)))   # cheap row-only pad

        vmem = pl.BlockSpec(memory_space=pltpu.MemorySpace.VMEM)
        out = pl.pallas_call(
            mlp_kernel,
            out_shape=jax.ShapeDtypeStruct((Bp, OUT_PAD), OUT_DTYPE),
            in_specs=[vmem] * (1 + len(flat)),
            out_specs=vmem,
            cost_estimate=_cost_estimate(Bp, flat),
        )(xf, *flat)
    else:
        # Large batch: batch-tiled grid with resident weights.  Always >= 2
        # grid steps so the "parallel" batch axis can shard across both v7x
        # TensorCores; tile capped at 2048 rows for v5e VMEM headroom.
        tile_b = min(TILE_B_MAX, _round_up((B + 1) // 2, 8))
        Bp = _round_up(B, tile_b)
        if Bp != B:
            xf = jnp.pad(xf, ((0, Bp - B), (0, 0)))   # cheap row-only pad

        in_specs = [pl.BlockSpec((tile_b, NUM_FEATURES), lambda i: (i, 0))]
        for a in flat:                                # weights resident
            in_specs.append(pl.BlockSpec(a.shape, lambda i: (0, 0)))
        out_specs = pl.BlockSpec((tile_b, OUT_PAD), lambda i: (i, 0))

        out = pl.pallas_call(
            mlp_kernel,
            out_shape=jax.ShapeDtypeStruct((Bp, OUT_PAD), OUT_DTYPE),
            grid=(Bp // tile_b,),
            in_specs=in_specs,
            out_specs=out_specs,
            compiler_params=pltpu.CompilerParams(
                dimension_semantics=("parallel",)),
            cost_estimate=_cost_estimate(Bp, flat),
        )(xf, *flat)

    return out[:B, :NUM_CLASSES].astype(jnp.float32)


# ----------------------------------------------------------------------------
# Pure-JAX reference (same bf16-in / f32-accumulate numerics as the kernel)
# ----------------------------------------------------------------------------
def net_forward_ref(x, params):
    h = x.reshape(-1, NUM_FEATURES).astype(jnp.bfloat16)
    n = len(params)
    logits = None
    for i, (w, b) in enumerate(params):
        y = jnp.dot(h, w.astype(jnp.bfloat16),
                    preferred_element_type=jnp.float32) + b
        if i < n - 1:
            y = jnp.where(y >= 0, y, NEG_SLOPE * y)
            h = y.astype(jnp.bfloat16)
        else:
            logits = y
    return jax.nn.log_softmax(logits, axis=1)


# ----------------------------------------------------------------------------
if __name__ == "__main__":
    key = jax.random.PRNGKey(0)
    key, kx, kx2 = jax.random.split(key, 3)

    params = init_params(jax.random.PRNGKey(42))
    params_p = prep_params(params)

    # Small-batch (gridless) path.
    B = 8
    x = jax.random.normal(kx, (B, NUM_FEATURES), jnp.float32)
    out = jax.block_until_ready(net_forward(x, params_p))
    ref = net_forward_ref(x, params)
    assert out.shape == (B, NUM_CLASSES)
    assert bool(jnp.all(jnp.isfinite(out)))
    assert jnp.allclose(out, ref, atol=2e-2, rtol=2e-2)

    # Large-batch (batch-tiled, 2-step parallel-grid) path.
    B2 = 2500
    x2 = jax.random.normal(kx2, (B2, NUM_FEATURES), jnp.float32)
    out2 = jax.block_until_ready(net_forward(x2, params_p))
    ref2 = net_forward_ref(x2, params)
    assert out2.shape == (B2, NUM_CLASSES)
    assert bool(jnp.all(jnp.isfinite(out2)))
    assert jnp.allclose(out2, ref2, atol=2e-2, rtol=2e-2)

    print("KERNEL_OK")
</pallas_src>

<mosaic_0001>
module attributes {stable_mosaic.version = 11 : i64} {
  func.func @mlp_kernel(%arg0: memref<8x32xf32, #tpu.memory_space<vmem>>, %arg1: memref<32x256xbf16, #tpu.memory_space<vmem>>, %arg2: memref<1x256xf32, #tpu.memory_space<vmem>>, %arg3: memref<256x512xbf16, #tpu.memory_space<vmem>>, %arg4: memref<1x512xf32, #tpu.memory_space<vmem>>, %arg5: memref<512x128xbf16, #tpu.memory_space<vmem>>, %arg6: memref<1x128xf32, #tpu.memory_space<vmem>>, %arg7: memref<128x128xbf16, #tpu.memory_space<vmem>>, %arg8: memref<1x128xf32, #tpu.memory_space<vmem>>, %arg9: memref<128x128xbf16, #tpu.memory_space<vmem>>, %arg10: memref<1x128xf32, #tpu.memory_space<vmem>>, %arg11: memref<8x128xbf16, #tpu.memory_space<vmem>>) attributes {dimension_semantics = [], scalar_prefetch = 0 : i64, scratch_operands = 0 : i64, tpu.core_type = #tpu.core_type<tc>} {
    %c0 = arith.constant 0 : index
    %c0_0 = arith.constant 0 : index
    %0 = vector.load %arg0[%c0, %c0_0] : memref<8x32xf32, #tpu.memory_space<vmem>>, vector<8x32xf32>
    %1 = arith.truncf %0 : vector<8x32xf32> to vector<8x32xbf16>
    %c0_1 = arith.constant 0 : index
    %c0_2 = arith.constant 0 : index
    %2 = vector.load %arg1[%c0_1, %c0_2] : memref<32x256xbf16, #tpu.memory_space<vmem>>, vector<32x256xbf16>
    %cst = arith.constant dense<0.000000e+00> : vector<8x256xf32>
    %3 = tpu.matmul %1, %2, %cst {dimension_numbers = #tpu.dot_dimension_numbers<[1], [0], [0], [1], [0, 0, 1, 1], [], []>} : vector<8x32xbf16>, vector<32x256xbf16>, vector<8x256xf32> -> vector<8x256xf32>
    %c0_3 = arith.constant 0 : index
    %c0_4 = arith.constant 0 : index
    %4 = vector.load %arg2[%c0_3, %c0_4] : memref<1x256xf32, #tpu.memory_space<vmem>>, vector<1x256xf32>
    %5 = vector.broadcast %4 : vector<1x256xf32> to vector<8x256xf32>
    %6 = arith.addf %3, %5 : vector<8x256xf32>
    %cst_5 = arith.constant 0.000000e+00 : f32
    %7 = vector.broadcast %cst_5 : f32 to vector<8x256xf32>
    %8 = arith.cmpf oge, %6, %7 : vector<8x256xf32>
    %cst_6 = arith.constant 2.000000e-01 : f32
    %9 = vector.broadcast %cst_6 : f32 to vector<8x256xf32>
    %10 = arith.mulf %9, %6 : vector<8x256xf32>
    %11 = arith.select %8, %6, %10 : vector<8x256xi1>, vector<8x256xf32>
    %12 = arith.truncf %11 : vector<8x256xf32> to vector<8x256xbf16>
    %c0_7 = arith.constant 0 : index
    %c0_8 = arith.constant 0 : index
    %13 = vector.load %arg3[%c0_7, %c0_8] : memref<256x512xbf16, #tpu.memory_space<vmem>>, vector<256x512xbf16>
    %cst_9 = arith.constant dense<0.000000e+00> : vector<8x512xf32>
    %14 = tpu.matmul %12, %13, %cst_9 {dimension_numbers = #tpu.dot_dimension_numbers<[1], [0], [0], [1], [0, 0, 1, 1], [], []>} : vector<8x256xbf16>, vector<256x512xbf16>, vector<8x512xf32> -> vector<8x512xf32>
    %c0_10 = arith.constant 0 : index
    %c0_11 = arith.constant 0 : index
    %15 = vector.load %arg4[%c0_10, %c0_11] : memref<1x512xf32, #tpu.memory_space<vmem>>, vector<1x512xf32>
    %16 = vector.broadcast %15 : vector<1x512xf32> to vector<8x512xf32>
    %17 = arith.addf %14, %16 : vector<8x512xf32>
    %cst_12 = arith.constant 0.000000e+00 : f32
    %18 = vector.broadcast %cst_12 : f32 to vector<8x512xf32>
    %19 = arith.cmpf oge, %17, %18 : vector<8x512xf32>
    %cst_13 = arith.constant 2.000000e-01 : f32
    %20 = vector.broadcast %cst_13 : f32 to vector<8x512xf32>
    %21 = arith.mulf %20, %17 : vector<8x512xf32>
    %22 = arith.select %19, %17, %21 : vector<8x512xi1>, vector<8x512xf32>
    %23 = arith.truncf %22 : vector<8x512xf32> to vector<8x512xbf16>
    %c0_14 = arith.constant 0 : index
    %c0_15 = arith.constant 0 : index
    %24 = vector.load %arg5[%c0_14, %c0_15] : memref<512x128xbf16, #tpu.memory_space<vmem>>, vector<512x128xbf16>
    %cst_16 = arith.constant dense<0.000000e+00> : vector<8x128xf32>
    %25 = tpu.matmul %23, %24, %cst_16 {dimension_numbers = #tpu.dot_dimension_numbers<[1], [0], [0], [1], [0, 0, 1, 1], [], []>} : vector<8x512xbf16>, vector<512x128xbf16>, vector<8x128xf32> -> vector<8x128xf32>
    %c0_17 = arith.constant 0 : index
    %c0_18 = arith.constant 0 : index
    %26 = vector.load %arg6[%c0_17, %c0_18] : memref<1x128xf32, #tpu.memory_space<vmem>>, vector<1x128xf32>
    %27 = vector.broadcast %26 : vector<1x128xf32> to vector<8x128xf32>
    %28 = arith.addf %25, %27 : vector<8x128xf32>
    %cst_19 = arith.constant 0.000000e+00 : f32
    %29 = vector.broadcast %cst_19 : f32 to vector<8x128xf32>
    %30 = arith.cmpf oge, %28, %29 : vector<8x128xf32>
    %cst_20 = arith.constant 2.000000e-01 : f32
    %31 = vector.broadcast %cst_20 : f32 to vector<8x128xf32>
    %32 = arith.mulf %31, %28 : vector<8x128xf32>
    %33 = arith.select %30, %28, %32 : vector<8x128xi1>, vector<8x128xf32>
    %34 = arith.truncf %33 : vector<8x128xf32> to vector<8x128xbf16>
    %c0_21 = arith.constant 0 : index
    %c0_22 = arith.constant 0 : index
    %35 = vector.load %arg7[%c0_21, %c0_22] : memref<128x128xbf16, #tpu.memory_space<vmem>>, vector<128x128xbf16>
    %cst_23 = arith.constant dense<0.000000e+00> : vector<8x128xf32>
    %36 = tpu.matmul %34, %35, %cst_23 {dimension_numbers = #tpu.dot_dimension_numbers<[1], [0], [0], [1], [0, 0, 1, 1], [], []>} : vector<8x128xbf16>, vector<128x128xbf16>, vector<8x128xf32> -> vector<8x128xf32>
    %c0_24 = arith.constant 0 : index
    %c0_25 = arith.constant 0 : index
    %37 = vector.load %arg8[%c0_24, %c0_25] : memref<1x128xf32, #tpu.memory_space<vmem>>, vector<1x128xf32>
    %38 = vector.broadcast %37 : vector<1x128xf32> to vector<8x128xf32>
    %39 = arith.addf %36, %38 : vector<8x128xf32>
    %cst_26 = arith.constant 0.000000e+00 : f32
    %40 = vector.broadcast %cst_26 : f32 to vector<8x128xf32>
    %41 = arith.cmpf oge, %39, %40 : vector<8x128xf32>
    %cst_27 = arith.constant 2.000000e-01 : f32
    %42 = vector.broadcast %cst_27 : f32 to vector<8x128xf32>
    %43 = arith.mulf %42, %39 : vector<8x128xf32>
    %44 = arith.select %41, %39, %43 : vector<8x128xi1>, vector<8x128xf32>
    %45 = arith.truncf %44 : vector<8x128xf32> to vector<8x128xbf16>
    %c0_28 = arith.constant 0 : index
    %c0_29 = arith.constant 0 : index
    %46 = vector.load %arg9[%c0_28, %c0_29] : memref<128x128xbf16, #tpu.memory_space<vmem>>, vector<128x128xbf16>
    %cst_30 = arith.constant dense<0.000000e+00> : vector<8x128xf32>
    %47 = tpu.matmul %45, %46, %cst_30 {dimension_numbers = #tpu.dot_dimension_numbers<[1], [0], [0], [1], [0, 0, 1, 1], [], []>} : vector<8x128xbf16>, vector<128x128xbf16>, vector<8x128xf32> -> vector<8x128xf32>
    %c0_31 = arith.constant 0 : index
    %c0_32 = arith.constant 0 : index
    %48 = vector.load %arg10[%c0_31, %c0_32] : memref<1x128xf32, #tpu.memory_space<vmem>>, vector<1x128xf32>
    %49 = vector.broadcast %48 : vector<1x128xf32> to vector<8x128xf32>
    %50 = arith.addf %47, %49 : vector<8x128xf32>
    %51 = tpu.iota {dimensions = array<i32: 1>} : vector<8x128xi32>
    %c2_i32 = arith.constant 2 : i32
    %52 = vector.broadcast %c2_i32 : i32 to vector<8x128xi32>
    %53 = arith.cmpi slt, %51, %52 : vector<8x128xi32>
    %cst_33 = arith.constant -1.000000e+30 : f32
    %54 = vector.broadcast %cst_33 : f32 to vector<8x128xf32>
    %55 = arith.select %53, %50, %54 : vector<8x128xi1>, vector<8x128xf32>
    %cst_34 = arith.constant dense<0xFF800000> : vector<8xf32>
    %56 = vector.multi_reduction <maximumf>, %55, %cst_34 [1] : vector<8x128xf32> to vector<8xf32>
    %57 = vector.shape_cast %56 : vector<8xf32> to vector<8x1xf32>
    %58 = vector.broadcast %57 : vector<8x1xf32> to vector<8x128xf32>
    %59 = arith.subf %55, %58 : vector<8x128xf32>
    %60 = math.exp %59 : vector<8x128xf32>
    %cst_35 = arith.constant dense<0.000000e+00> : vector<8xf32>
    %61 = vector.multi_reduction <add>, %60, %cst_35 [1] : vector<8x128xf32> to vector<8xf32>
    %62 = vector.shape_cast %61 : vector<8xf32> to vector<8x1xf32>
    %63 = math.log %62 : vector<8x1xf32>
    %64 = vector.broadcast %63 : vector<8x1xf32> to vector<8x128xf32>
    %65 = arith.subf %59, %64 : vector<8x128xf32>
    %66 = arith.truncf %65 : vector<8x128xf32> to vector<8x128xbf16>
    %c0_36 = arith.constant 0 : index
    %c0_37 = arith.constant 0 : index
    %67 = vector.load %arg11[%c0_36, %c0_37] : memref<8x128xbf16, #tpu.memory_space<vmem>>, vector<8x128xbf16>
    tpu.vector_store %arg11[%c0_36, %c0_37], %66 {strides = array<i32>} : memref<8x128xbf16, #tpu.memory_space<vmem>>, vector<8x128xbf16>,
    return
  }
}

</mosaic_0001>

<llo_original>
// kernel: tpu_custom_call.1
$region0: #{tpu_custom_call.1}
  #allocation0 [shape = 'u32[]', space=smem, size = 0x4, offset = 0x4, fixed_abs, tag = 'smem constant byte address 0x4 - core index']
  #allocation1 [shape = 'u32[144,128]{1,0:T(1,128)}', space=vmem, size = 0x12000, scoped, tag = 'internal scratch']
  %s0 = inlined_call_operand.hbm [shape: f32[8,32], index: 0, kind: input, shape index: {}]
  %s1 = inlined_call_operand.hbm [shape: bf16[32,256], index: 1, kind: input, shape index: {}]
  %s2 = inlined_call_operand.vmem [shape: f32[1,256], index: 2, kind: input, shape index: {}]
  %s3 = inlined_call_operand.hbm [shape: bf16[256,512], index: 3, kind: input, shape index: {}]
  %s4 = inlined_call_operand.vmem [shape: f32[1,512], index: 4, kind: input, shape index: {}]
  %s5 = inlined_call_operand.hbm [shape: bf16[512,128], index: 5, kind: input, shape index: {}]
  %s6 = inlined_call_operand.vmem [shape: f32[1,128], index: 6, kind: input, shape index: {}]
  %s7 = inlined_call_operand.hbm [shape: bf16[128,128], index: 7, kind: input, shape index: {}]
  %s8 = inlined_call_operand.vmem [shape: f32[1,128], index: 8, kind: input, shape index: {}]
  %s9 = inlined_call_operand.hbm [shape: bf16[128,128], index: 9, kind: input, shape index: {}]
  %s10 = inlined_call_operand.vmem [shape: f32[1,128], index: 10, kind: input, shape index: {}]
  %s11 = inlined_call_operand.hbm [shape: bf16[8,128], index: 11, kind: output, shape index: {}]
  %s12 = sld [smem:[#allocation0]]
  $region78: #{tpu_custom_call.1} parent=0
    _
  %s14 = ssub.s32 1, %s12
  %s15 = scalar_select 0, %s14, %s12
  $region1: #{tpu_custom_call.1} parent=0
    #allocation2 [shape = 'u8[4096]{0}', space=vmem, size = 0x1000, scoped, tag = 'input window, operand 0, single buffered']
    #allocation3 [shape = 's32[1]{0}', space=sflag, size = 0x4, scoped, tag = 'scoped memory for tpu_custom_call.1']
    #allocation4 [shape = 's32[1]{0}', space=sflag, size = 0x4, scoped, tag = 'scoped memory for tpu_custom_call.1']
    #allocation5 [shape = 'u8[16384]{0}', space=vmem, size = 0x4000, scoped, tag = 'input window, operand 1, single buffered']
    #allocation6 [shape = 's32[1]{0}', space=sflag, size = 0x4, scoped, tag = 'scoped memory for tpu_custom_call.1']
    #allocation7 [shape = 'u8[262144]{0}', space=vmem, size = 0x40000, scoped, tag = 'input window, operand 3, single buffered']
    #allocation8 [shape = 'u8[131072]{0}', space=vmem, size = 0x20000, scoped, tag = 'input window, operand 5, single buffered']
    #allocation9 [shape = 's32[1]{0}', space=sflag, size = 0x4, scoped, tag = 'scoped memory for tpu_custom_call.1']
    #allocation10 [shape = 'u8[32768]{0}', space=vmem, size = 0x8000, scoped, tag = 'input window, operand 7, single buffered']
    #allocation11 [shape = 'u8[32768]{0}', space=vmem, size = 0x8000, scoped, tag = 'input window, operand 9, single buffered']
    #allocation12 [shape = 's32[1]{0}', space=sflag, size = 0x4, scoped, tag = 'scoped memory for tpu_custom_call.1']
    #allocation13 [shape = 'u8[2048]{0}', space=vmem, size = 0x800, scoped, tag = 'output window, operand 0, single buffered']
    %16 = vsyncpa [#allocation3], 0
    %17 = vsyncpa [#allocation6], 0
    %18 = vsyncpa [#allocation9], 0
    %19 = vsyncpa [#allocation12], 0
    %20 = vsyncpa [#allocation4], 0
    // Predicated region
    $region2: #{tpu_custom_call.1} parent=1 // pred_check
      _
    $region3: #{tpu_custom_call.1} parent=1 // pred_check_branch
      %22 = sbr.rel (0) target = $region5
    $region4: #{tpu_custom_call.1} parent=1 // pred_region
      %s24 = ssub.s32 128, 128
      %25 = vsyncadd [#allocation3], %s24
      %s27 = sshll.u32 [#allocation2], 4
      %s28 = int_to_ptr.vmem [resolvable:$true] %s27
      %30 = dma.hbm_to_vmem [thread:$0]  %s0, 128, %s28, [#allocation3]
    $region5: #{tpu_custom_call.1} parent=1 // pred_fallthru
      _
    // Predicated region
    $region6: #{tpu_custom_call.1} parent=1 // pred_check
      _
    $region7: #{tpu_custom_call.1} parent=1 // pred_check_branch
      %32 = sbr.rel (0) target = $region9
    $region8: #{tpu_custom_call.1} parent=1 // pred_region
      %s34 = ssub.s32 512, 512
      %35 = vsyncadd [#allocation6], %s34
      %s36 = sshll.u32 [#allocation5], 4
      %s37 = int_to_ptr.vmem [resolvable:$true] %s36
      %42 = dma.hbm_to_vmem [thread:$0]  %s1, 512, %s37, [#allocation6], 128, 128, 8
    $region9: #{tpu_custom_call.1} parent=1 // pred_fallthru
      _
    // Predicated region
    $region10: #{tpu_custom_call.1} parent=1 // pred_check
      _
    $region11: #{tpu_custom_call.1} parent=1 // pred_check_branch
      %44 = sbr.rel (0) target = $region13
    $region12: #{tpu_custom_call.1} parent=1 // pred_region
      _
    $region13: #{tpu_custom_call.1} parent=1 // pred_fallthru
      _
    // Predicated region
    $region14: #{tpu_custom_call.1} parent=1 // pred_check
      _
    $region15: #{tpu_custom_call.1} parent=1 // pred_check_branch
      %46 = sbr.rel (0) target = $region17
    $region16: #{tpu_custom_call.1} parent=1 // pred_region
      %s48 = ssub.s32 8192, 8192
      %49 = vsyncadd [#allocation6], %s48
      %s50 = sshll.u32 [#allocation7], 4
      %s51 = int_to_ptr.vmem [resolvable:$true] %s50
      %56 = dma.hbm_to_vmem [thread:$0]  %s3, 8192, %s51, [#allocation6], 256, 256, 16
    $region17: #{tpu_custom_call.1} parent=1 // pred_fallthru
      _
    // Predicated region
    $region18: #{tpu_custom_call.1} parent=1 // pred_check
      _
    $region19: #{tpu_custom_call.1} parent=1 // pred_check_branch
      %58 = sbr.rel (0) target = $region21
    $region20: #{tpu_custom_call.1} parent=1 // pred_region
      _
    $region21: #{tpu_custom_call.1} parent=1 // pred_fallthru
      _
    // Predicated region
    $region22: #{tpu_custom_call.1} parent=1 // pred_check
      _
    $region23: #{tpu_custom_call.1} parent=1 // pred_check_branch
      %60 = sbr.rel (0) target = $region25
    $region24: #{tpu_custom_call.1} parent=1 // pred_region
      %s62 = ssub.s32 4096, 4096
      %63 = vsyncadd [#allocation9], %s62
      %s64 = sshll.u32 [#allocation8], 4
      %s65 = int_to_ptr.vmem [resolvable:$true] %s64
      %70 = dma.hbm_to_vmem [thread:$0]  %s5, 4096, %s65, [#allocation9], 64, 64, 4
    $region25: #{tpu_custom_call.1} parent=1 // pred_fallthru
      _
    // Predicated region
    $region26: #{tpu_custom_call.1} parent=1 // pred_check
      _
    $region27: #{tpu_custom_call.1} parent=1 // pred_check_branch
      %72 = sbr.rel (0) target = $region29
    $region28: #{tpu_custom_call.1} parent=1 // pred_region
      _
    $region29: #{tpu_custom_call.1} parent=1 // pred_fallthru
      _
    // Predicated region
    $region30: #{tpu_custom_call.1} parent=1 // pred_check
      _
    $region31: #{tpu_custom_call.1} parent=1 // pred_check_branch
      %74 = sbr.rel (0) target = $region33
    $region32: #{tpu_custom_call.1} parent=1 // pred_region
      %s76 = ssub.s32 1024, 1024
      %77 = vsyncadd [#allocation9], %s76
      %s78 = sshll.u32 [#allocation10], 4
      %s79 = int_to_ptr.vmem [resolvable:$true] %s78
      %84 = dma.hbm_to_vmem [thread:$0]  %s7, 1024, %s79, [#allocation9], 64, 64, 4
    $region33: #{tpu_custom_call.1} parent=1 // pred_fallthru
      _
    // Predicated region
    $region34: #{tpu_custom_call.1} parent=1 // pred_check
      _
    $region35: #{tpu_custom_call.1} parent=1 // pred_check_branch
      %86 = sbr.rel (0) target = $region37
    $region36: #{tpu_custom_call.1} parent=1 // pred_region
      _
    $region37: #{tpu_custom_call.1} parent=1 // pred_fallthru
      _
    // Predicated region
    $region38: #{tpu_custom_call.1} parent=1 // pred_check
      _
    $region39: #{tpu_custom_call.1} parent=1 // pred_check_branch
      %88 = sbr.rel (0) target = $region41
    $region40: #{tpu_custom_call.1} parent=1 // pred_region
      %s90 = ssub.s32 1024, 1024
      %91 = vsyncadd [#allocation12], %s90
      %s92 = sshll.u32 [#allocation11], 4
      %s93 = int_to_ptr.vmem [resolvable:$true] %s92
      %98 = dma.hbm_to_vmem [thread:$0]  %s9, 1024, %s93, [#allocation12], 64, 64, 4
    $region41: #{tpu_custom_call.1} parent=1 // pred_fallthru
      _
    // Predicated region
    $region42: #{tpu_custom_call.1} parent=1 // pred_check
      _
    $region43: #{tpu_custom_call.1} parent=1 // pred_check_branch
      %100 = sbr.rel (0) target = $region45
    $region44: #{tpu_custom_call.1} parent=1 // pred_region
      _
    $region45: #{tpu_custom_call.1} parent=1 // pred_fallthru
      _
    // Predicated region
    $region46: #{tpu_custom_call.1} parent=1 // pred_check
      _
    $region47: #{tpu_custom_call.1} parent=1 // pred_check_branch
      %102 = sbr.rel (0) target = $region49
    $region48: #{tpu_custom_call.1} parent=1 // pred_region
      %103 = dma.done [#allocation3], 128
    $region49: #{tpu_custom_call.1} parent=1 // pred_fallthru
      _
    // Predicated region
    $region50: #{tpu_custom_call.1} parent=1 // pred_check
      _
    $region51: #{tpu_custom_call.1} parent=1 // pred_check_branch
      %105 = sbr.rel (0) target = $region53
    $region52: #{tpu_custom_call.1} parent=1 // pred_region
      %106 = dma.done [#allocation6], 512
    $region53: #{tpu_custom_call.1} parent=1 // pred_fallthru
      _
    // Predicated region
    $region54: #{tpu_custom_call.1} parent=1 // pred_check
      _
    $region55: #{tpu_custom_call.1} parent=1 // pred_check_branch
      %108 = sbr.rel (0) target = $region57
    $region56: #{tpu_custom_call.1} parent=1 // pred_region
      %109 = dma.done [#allocation6], 8192
    $region57: #{tpu_custom_call.1} parent=1 // pred_fallthru
      _
    // Predicated region
    $region58: #{tpu_custom_call.1} parent=1 // pred_check
      _
    $region59: #{tpu_custom_call.1} parent=1 // pred_check_branch
      %111 = sbr.rel (0) target = $region61
    $region60: #{tpu_custom_call.1} parent=1 // pred_region
      %112 = dma.done [#allocation9], 4096
    $region61: #{tpu_custom_call.1} parent=1 // pred_fallthru
      _
    // Predicated region
    $region62: #{tpu_custom_call.1} parent=1 // pred_check
      _
    $region63: #{tpu_custom_call.1} parent=1 // pred_check_branch
      %114 = sbr.rel (0) target = $region65
    $region64: #{tpu_custom_call.1} parent=1 // pred_region
      %115 = dma.done [#allocation9], 1024
    $region65: #{tpu_custom_call.1} parent=1 // pred_fallthru
      _
    // Predicated region
    $region66: #{tpu_custom_call.1} parent=1 // pred_check
      _
    $region67: #{tpu_custom_call.1} parent=1 // pred_check_branch
      %117 = sbr.rel (0) target = $region69
    $region68: #{tpu_custom_call.1} parent=1 // pred_region
      %118 = dma.done [#allocation12], 1024
    $region69: #{tpu_custom_call.1} parent=1 // pred_fallthru
      _
    %v120 = vld [vmem:[#allocation2] sm:$0xff]
    %v121 = vpack.c.bf16 %v120, %v120
    %v122 = vld [vmem:[#allocation5] sm:$0xff]
    %v123 = vld [vmem:[#allocation5 + $0x8] sm:$0xff]
    %v124 = vld [vmem:[#allocation5 + $0x10] sm:$0xff]
    %v125 = vld [vmem:[#allocation5 + $0x18] sm:$0xff]
    %v126 = vld [vmem:[%s2] sm:$0x3]
    %v128 = vlaneseq
    %v129 = vshrl.u32 %v128, 7
    %v130 = vsub.s32 0, %v129
    %v131 = vrot.slane %v126, %v130
    %v132 = vlaneseq
    %v133 = vshrl.u32 %v132, 7
    %v134 = vsub.s32 1, %v133
    %v135 = vrot.slane %v126, %v134
    %v142 = vunpack.c.l.b16 %v122
    %v143 = vunpack.c.h.b16 %v122
    %v144 = vunpack.c.l.b16 %v123
    %v145 = vunpack.c.h.b16 %v123
    %v146 = vunpack.c.l.b16 %v124
    %v147 = vunpack.c.h.b16 %v124
    %v148 = vunpack.c.l.b16 %v125
    %v149 = vunpack.c.h.b16 %v125
    %v150 = vpack.c.b16 %v144, %v142
    %v151 = vpack.c.b16 %v145, %v143
    %v152 = vpack.c.b16 %v148, %v146
    %v153 = vpack.c.b16 %v149, %v147
    %vm158 = vcmask 261120
    %v160 = vsel %vm158, %v121, 0
    %162 = vmatprep.subr.bf16.mxu0 %v151
    %163 = vmatpush1.bf16.msra.mxu0 %v150
    %164 = vmatprep.subr.bf16.mxu0 %v153
    %165 = vmatpush1.bf16.msra.mxu0 %v152
    %166 = vmatprep.subr.bf16.mxu0 0
    %167 = vmatpush1.bf16.msra.mxu0 0
    %168 = vmatprep.subr.bf16.mxu0 0
    %169 = vmatpush1.bf16.msra.mxu0 0
    %170 = vmatprep.subr.bf16.mxu0 0
    %171 = vmatpush1.bf16.msra.mxu0 0
    %172 = vmatprep.subr.bf16.mxu0 0
    %173 = vmatpush1.bf16.msra.mxu0 0
    %174 = vmatprep.subr.bf16.mxu0 0
    %175 = vmatpush1.bf16.msra.mxu0 0
    %176 = vmatprep.subr.bf16.mxu0 0
    %177 = vmatpush1.bf16.msra.mxu0 0
    %178 = vmatprep.subr.bf16.mxu0 0
    %179 = vmatpush1.bf16.msra.mxu0 0
    %180 = vmatprep.subr.bf16.mxu0 0
    %181 = vmatpush1.bf16.msra.mxu0 0
    %182 = vmatprep.subr.bf16.mxu0 0
    %183 = vmatpush1.bf16.msra.mxu0 0
    %184 = vmatprep.subr.bf16.mxu0 0
    %185 = vmatpush1.bf16.msra.mxu0 0
    %186 = vmatprep.subr.bf16.mxu0 0
    %187 = vmatpush1.bf16.msra.mxu0 0
    %188 = vmatprep.subr.bf16.mxu0 0
    %189 = vmatpush1.bf16.msra.mxu0 0
    %190 = vmatprep.subr.bf16.mxu0 0
    %191 = vmatpush1.bf16.msra.mxu0 0
    %192 = vmatprep.subr.bf16.mxu0 0
    %193 = vmatpush1.bf16.msra.mxu0 0
    %194 = vmatprep.mubr.bf16.mxu0 0
    %195 = vmatmul.mubr.bf16.gmra.mrb[0].mxu0 %v160
    %v196 = vpop.f32.mrb[0].mxu0
    %v197 = vadd.f32 %v131, %v196
    %v198 = vpop.f32.mrb[0].mxu0
    %v199 = vadd.f32 %v135, %v198
    %v200 = vpop.f32.mrb[0].mxu0
    %v201 = vpop.f32.mrb[0].mxu0
    %202 = vdwg.mxu0
    %vm203 = vcmp.ge.f32.partialorder %v197, 0.0
    %vm204 = vcmp.ge.f32.partialorder %v199, 0.0
    %v205 = vmul.f32 %v197, 0.2
    %v206 = vmul.f32 %v199, 0.2
    %v207 = vsel %vm203, %v197, %v205
    %v208 = vsel %vm204, %v199, %v206
    %v209 = vpack.c.bf16 %v207, %v207
    %v210 = vpack.c.bf16 %v208, %v208
    %v211 = vld [vmem:[#allocation7] sm:$0xff]
    %v212 = vld [vmem:[#allocation7 + $0x8] sm:$0xff]
    %v213 = vld [vmem:[#allocation7 + $0x10] sm:$0xff]
    %v214 = vld [vmem:[#allocation7 + $0x18] sm:$0xff]
    %v215 = vld [vmem:[#allocation7 + $0x20] sm:$0xff]
    %v216 = vld [vmem:[#allocation7 + $0x28] sm:$0xff]
    %v217 = vld [vmem:[#allocation7 + $0x30] sm:$0xff]
    %v218 = vld [vmem:[#allocation7 + $0x38] sm:$0xff]
    %v219 = vld [vmem:[#allocation7 + $0x40] sm:$0xff]
    %v220 = vld [vmem:[#allocation7 + $0x48] sm:$0xff]
    %v221 = vld [vmem:[#allocation7 + $0x50] sm:$0xff]
    %v222 = vld [vmem:[#allocation7 + $0x58] sm:$0xff]
    %v223 = vld [vmem:[#allocation7 + $0x60] sm:$0xff]
    %v224 = vld [vmem:[#allocation7 + $0x68] sm:$0xff]
    %v225 = vld [vmem:[#allocation7 + $0x70] sm:$0xff]
    %v226 = vld [vmem:[#allocation7 + $0x78] sm:$0xff]
    %v227 = vld [vmem:[#allocation7 + $0x80] sm:$0xff]
    %v228 = vld [vmem:[#allocation7 + $0x88] sm:$0xff]
    %v229 = vld [vmem:[#allocation7 + $0x90] sm:$0xff]
    %v230 = vld [vmem:[#allocation7 + $0x98] sm:$0xff]
    %v231 = vld [vmem:[#allocation7 + $0xa0] sm:$0xff]
    %v232 = vld [vmem:[#allocation7 + $0xa8] sm:$0xff]
    %v233 = vld [vmem:[#allocation7 + $0xb0] sm:$0xff]
    %v234 = vld [vmem:[#allocation7 + $0xb8] sm:$0xff]
    %v235 = vld [vmem:[#allocation7 + $0xc0] sm:$0xff]
    %v236 = vld [vmem:[#allocation7 + $0xc8] sm:$0xff]
    %v237 = vld [vmem:[#allocation7 + $0xd0] sm:$0xff]
    %v238 = vld [vmem:[#allocation7 + $0xd8] sm:$0xff]
    %v239 = vld [vmem:[#allocation7 + $0xe0] sm:$0xff]
    %v240 = vld [vmem:[#allocation7 + $0xe8] sm:$0xff]
    %v241 = vld [vmem:[#allocation7 + $0xf0] sm:$0xff]
    %v242 = vld [vmem:[#allocation7 + $0xf8] sm:$0xff]
    %v243 = vld [vmem:[#allocation7 + $0x100] sm:$0xff]
    %v244 = vld [vmem:[#allocation7 + $0x108] sm:$0xff]
    %v245 = vld [vmem:[#allocation7 + $0x110] sm:$0xff]
    %v246 = vld [vmem:[#allocation7 + $0x118] sm:$0xff]
    %v247 = vld [vmem:[#allocation7 + $0x120] sm:$0xff]
    %v248 = vld [vmem:[#allocation7 + $0x128] sm:$0xff]
    %v249 = vld [vmem:[#allocation7 + $0x130] sm:$0xff]
    %v250 = vld [vmem:[#allocation7 + $0x138] sm:$0xff]
    %v251 = vld [vmem:[#allocation7 + $0x140] sm:$0xff]
    %v252 = vld [vmem:[#allocation7 + $0x148] sm:$0xff]
    %v253 = vld [vmem:[#allocation7 + $0x150] sm:$0xff]
    %v254 = vld [vmem:[#allocation7 + $0x158] sm:$0xff]
    %v255 = vld [vmem:[#allocation7 + $0x160] sm:$0xff]
    %v256 = vld [vmem:[#allocation7 + $0x168] sm:$0xff]
    %v257 = vld [vmem:[#allocation7 + $0x170] sm:$0xff]
    %v258 = vld [vmem:[#allocation7 + $0x178] sm:$0xff]
    %v259 = vld [vmem:[#allocation7 + $0x180] sm:$0xff]
    %v260 = vld [vmem:[#allocation7 + $0x188] sm:$0xff]
    %v261 = vld [vmem:[#allocation7 + $0x190] sm:$0xff]
    %v262 = vld [vmem:[#allocation7 + $0x198] sm:$0xff]
    %v263 = vld [vmem:[#allocation7 + $0x1a0] sm:$0xff]
    %v264 = vld [vmem:[#allocation7 + $0x1a8] sm:$0xff]
    %v265 = vld [vmem:[#allocation7 + $0x1b0] sm:$0xff]
    %v266 = vld [vmem:[#allocation7 + $0x1b8] sm:$0xff]
    %v267 = vld [vmem:[#allocation7 + $0x1c0] sm:$0xff]
    %v268 = vld [vmem:[#allocation7 + $0x1c8] sm:$0xff]
    %v269 = vld [vmem:[#allocation7 + $0x1d0] sm:$0xff]
    %v270 = vld [vmem:[#allocation7 + $0x1d8] sm:$0xff]
    %v271 = vld [vmem:[#allocation7 + $0x1e0] sm:$0xff]
    %v272 = vld [vmem:[#allocation7 + $0x1e8] sm:$0xff]
    %v273 = vld [vmem:[#allocation7 + $0x1f0] sm:$0xff]
    %v274 = vld [vmem:[#allocation7 + $0x1f8] sm:$0xff]
    %v275 = vld [vmem:[%s4] sm:$0xf]
    %v277 = vlaneseq
    %v278 = vshrl.u32 %v277, 7
    %v279 = vsub.s32 0, %v278
    %v280 = vrot.slane %v275, %v279
    %v281 = vlaneseq
    %v282 = vshrl.u32 %v281, 7
    %v283 = vsub.s32 1, %v282
    %v284 = vrot.slane %v275, %v283
    %v285 = vlaneseq
    %v286 = vshrl.u32 %v285, 7
    %v287 = vsub.s32 2, %v286
    %v288 = vrot.slane %v275, %v287
    %v289 = vlaneseq
    %v290 = vshrl.u32 %v289, 7
    %v291 = vsub.s32 3, %v290
    %v292 = vrot.slane %v275, %v291
    %v361 = vunpack.c.l.b16 %v211
    %v362 = vunpack.c.h.b16 %v211
    %v363 = vunpack.c.l.b16 %v212
    %v364 = vunpack.c.h.b16 %v212
    %v365 = vunpack.c.l.b16 %v213
    %v366 = vunpack.c.h.b16 %v213
    %v367 = vunpack.c.l.b16 %v214
    %v368 = vunpack.c.h.b16 %v214
    %v369 = vunpack.c.l.b16 %v215
    %v370 = vunpack.c.h.b16 %v215
    %v371 = vunpack.c.l.b16 %v216
    %v372 = vunpack.c.h.b16 %v216
    %v373 = vunpack.c.l.b16 %v217
    %v374 = vunpack.c.h.b16 %v217
    %v375 = vunpack.c.l.b16 %v218
    %v376 = vunpack.c.h.b16 %v218
    %v377 = vunpack.c.l.b16 %v219
    %v378 = vunpack.c.h.b16 %v219
    %v379 = vunpack.c.l.b16 %v220
    %v380 = vunpack.c.h.b16 %v220
    %v381 = vunpack.c.l.b16 %v221
    %v382 = vunpack.c.h.b16 %v221
    %v383 = vunpack.c.l.b16 %v222
    %v384 = vunpack.c.h.b16 %v222
    %v385 = vunpack.c.l.b16 %v223
    %v386 = vunpack.c.h.b16 %v223
    %v387 = vunpack.c.l.b16 %v224
    %v388 = vunpack.c.h.b16 %v224
    %v389 = vunpack.c.l.b16 %v225
    %v390 = vunpack.c.h.b16 %v225
    %v391 = vunpack.c.l.b16 %v226
    %v392 = vunpack.c.h.b16 %v226
    %v393 = vunpack.c.l.b16 %v227
    %v394 = vunpack.c.h.b16 %v227
    %v395 = vunpack.c.l.b16 %v228
    %v396 = vunpack.c.h.b16 %v228
    %v397 = vunpack.c.l.b16 %v229
    %v398 = vunpack.c.h.b16 %v229
    %v399 = vunpack.c.l.b16 %v230
    %v400 = vunpack.c.h.b16 %v230
    %v401 = vunpack.c.l.b16 %v231
    %v402 = vunpack.c.h.b16 %v231
    %v403 = vunpack.c.l.b16 %v232
    %v404 = vunpack.c.h.b16 %v232
    %v405 = vunpack.c.l.b16 %v233
    %v406 = vunpack.c.h.b16 %v233
    %v407 = vunpack.c.l.b16 %v234
    %v408 = vunpack.c.h.b16 %v234
    %v409 = vunpack.c.l.b16 %v235
    %v410 = vunpack.c.h.b16 %v235
    %v411 = vunpack.c.l.b16 %v236
    %v412 = vunpack.c.h.b16 %v236
    %v413 = vunpack.c.l.b16 %v237
    %v414 = vunpack.c.h.b16 %v237
    %v415 = vunpack.c.l.b16 %v238
    %v416 = vunpack.c.h.b16 %v238
    %v417 = vunpack.c.l.b16 %v239
    %v418 = vunpack.c.h.b16 %v239
    %v419 = vunpack.c.l.b16 %v240
    %v420 = vunpack.c.h.b16 %v240
    %v421 = vunpack.c.l.b16 %v241
    %v422 = vunpack.c.h.b16 %v241
    %v423 = vunpack.c.l.b16 %v242
    %v424 = vunpack.c.h.b16 %v242
    %v425 = vunpack.c.l.b16 %v243
    %v426 = vunpack.c.h.b16 %v243
    %v427 = vunpack.c.l.b16 %v244
    %v428 = vunpack.c.h.b16 %v244
    %v429 = vunpack.c.l.b16 %v245
    %v430 = vunpack.c.h.b16 %v245
    %v431 = vunpack.c.l.b16 %v246
    %v432 = vunpack.c.h.b16 %v246
    %v433 = vunpack.c.l.b16 %v247
    %v434 = vunpack.c.h.b16 %v247
    %v435 = vunpack.c.l.b16 %v248
    %v436 = vunpack.c.h.b16 %v248
    %v437 = vunpack.c.l.b16 %v249
    %v438 = vunpack.c.h.b16 %v249
    %v439 = vunpack.c.l.b16 %v250
    %v440 = vunpack.c.h.b16 %v250
    %v441 = vunpack.c.l.b16 %v251
    %v442 = vunpack.c.h.b16 %v251
    %v443 = vunpack.c.l.b16 %v252
    %v444 = vunpack.c.h.b16 %v252
    %v445 = vunpack.c.l.b16 %v253
    %v446 = vunpack.c.h.b16 %v253
    %v447 = vunpack.c.l.b16 %v254
    %v448 = vunpack.c.h.b16 %v254
    %v449 = vunpack.c.l.b16 %v255
    %v450 = vunpack.c.h.b16 %v255
    %v451 = vunpack.c.l.b16 %v256
    %v452 = vunpack.c.h.b16 %v256
    %v453 = vunpack.c.l.b16 %v257
    %v454 = vunpack.c.h.b16 %v257
    %v455 = vunpack.c.l.b16 %v258
    %v456 = vunpack.c.h.b16 %v258
    %v457 = vunpack.c.l.b16 %v259
    %v458 = vunpack.c.h.b16 %v259
    %v459 = vunpack.c.l.b16 %v260
    %v460 = vunpack.c.h.b16 %v260
    %v461 = vunpack.c.l.b16 %v261
    %v462 = vunpack.c.h.b16 %v261
    %v463 = vunpack.c.l.b16 %v262
    %v464 = vunpack.c.h.b16 %v262
    %v465 = vunpack.c.l.b16 %v263
    %v466 = vunpack.c.h.b16 %v263
    %v467 = vunpack.c.l.b16 %v264
    %v468 = vunpack.c.h.b16 %v264
    %v469 = vunpack.c.l.b16 %v265
    %v470 = vunpack.c.h.b16 %v265
    %v471 = vunpack.c.l.b16 %v266
    %v472 = vunpack.c.h.b16 %v266
    %v473 = vunpack.c.l.b16 %v267
    %v474 = vunpack.c.h.b16 %v267
    %v475 = vunpack.c.l.b16 %v268
    %v476 = vunpack.c.h.b16 %v268
    %v477 = vunpack.c.l.b16 %v269
    %v478 = vunpack.c.h.b16 %v269
    %v479 = vunpack.c.l.b16 %v270
    %v480 = vunpack.c.h.b16 %v270
    %v481 = vunpack.c.l.b16 %v271
    %v482 = vunpack.c.h.b16 %v271
    %v483 = vunpack.c.l.b16 %v272
    %v484 = vunpack.c.h.b16 %v272
    %v485 = vunpack.c.l.b16 %v273
    %v486 = vunpack.c.h.b16 %v273
    %v487 = vunpack.c.l.b16 %v274
    %v488 = vunpack.c.h.b16 %v274
    %v489 = vpack.c.b16 %v365, %v361
    %v490 = vpack.c.b16 %v366, %v362
    %v491 = vpack.c.b16 %v367, %v363
    %v492 = vpack.c.b16 %v368, %v364
    %v493 = vpack.c.b16 %v373, %v369
    %v494 = vpack.c.b16 %v374, %v370
    %v495 = vpack.c.b16 %v375, %v371
    %v496 = vpack.c.b16 %v376, %v372
    %v497 = vpack.c.b16 %v381, %v377
    %v498 = vpack.c.b16 %v382, %v378
    %v499 = vpack.c.b16 %v383, %v379
    %v500 = vpack.c.b16 %v384, %v380
    %v501 = vpack.c.b16 %v389, %v385
    %v502 = vpack.c.b16 %v390, %v386
    %v503 = vpack.c.b16 %v391, %v387
    %v504 = vpack.c.b16 %v392, %v388
    %v505 = vpack.c.b16 %v397, %v393
    %v506 = vpack.c.b16 %v398, %v394
    %v507 = vpack.c.b16 %v399, %v395
    %v508 = vpack.c.b16 %v400, %v396
    %v509 = vpack.c.b16 %v405, %v401
    %v510 = vpack.c.b16 %v406, %v402
    %v511 = vpack.c.b16 %v407, %v403
    %v512 = vpack.c.b16 %v408, %v404
    %v513 = vpack.c.b16 %v413, %v409
    %v514 = vpack.c.b16 %v414, %v410
    %v515 = vpack.c.b16 %v415, %v411
    %v516 = vpack.c.b16 %v416, %v412
    %v517 = vpack.c.b16 %v421, %v417
    %v518 = vpack.c.b16 %v422, %v418
    %v519 = vpack.c.b16 %v423, %v419
    %v520 = vpack.c.b16 %v424, %v420
    %v521 = vpack.c.b16 %v429, %v425
    %v522 = vpack.c.b16 %v430, %v426
    %v523 = vpack.c.b16 %v431, %v427
    %v524 = vpack.c.b16 %v432, %v428
    %v525 = vpack.c.b16 %v437, %v433
    %v526 = vpack.c.b16 %v438, %v434
    %v527 = vpack.c.b16 %v439, %v435
    %v528 = vpack.c.b16 %v440, %v436
    %v529 = vpack.c.b16 %v445, %v441
    %v530 = vpack.c.b16 %v446, %v442
    %v531 = vpack.c.b16 %v447, %v443
    %v532 = vpack.c.b16 %v448, %v444
    %v533 = vpack.c.b16 %v453, %v449
    %v534 = vpack.c.b16 %v454, %v450
    %v535 = vpack.c.b16 %v455, %v451
    %v536 = vpack.c.b16 %v456, %v452
    %v537 = vpack.c.b16 %v461, %v457
    %v538 = vpack.c.b16 %v462, %v458
    %v539 = vpack.c.b16 %v463, %v459
    %v540 = vpack.c.b16 %v464, %v460
    %v541 = vpack.c.b16 %v469, %v465
    %v542 = vpack.c.b16 %v470, %v466
    %v543 = vpack.c.b16 %v471, %v467
    %v544 = vpack.c.b16 %v472, %v468
    %v545 = vpack.c.b16 %v477, %v473
    %v546 = vpack.c.b16 %v478, %v474
    %v547 = vpack.c.b16 %v479, %v475
    %v548 = vpack.c.b16 %v480, %v476
    %v549 = vpack.c.b16 %v485, %v481
    %v550 = vpack.c.b16 %v486, %v482
    %v551 = vpack.c.b16 %v487, %v483
    %v552 = vpack.c.b16 %v488, %v484
    %617 = vmatprep.subr.bf16.mxu0 %v490
    %618 = vmatpush1.bf16.msra.mxu0 %v489
    %619 = vmatprep.subr.bf16.mxu0 %v494
    %620 = vmatpush1.bf16.msra.mxu0 %v493
    %621 = vmatprep.subr.bf16.mxu0 %v498
    %622 = vmatpush1.bf16.msra.mxu0 %v497
    %623 = vmatprep.subr.bf16.mxu0 %v502
    %624 = vmatpush1.bf16.msra.mxu0 %v501
    %625 = vmatprep.subr.bf16.mxu0 %v506
    %626 = vmatpush1.bf16.msra.mxu0 %v505
    %627 = vmatprep.subr.bf16.mxu0 %v510
    %628 = vmatpush1.bf16.msra.mxu0 %v509
    %629 = vmatprep.subr.bf16.mxu0 %v514
    %630 = vmatpush1.bf16.msra.mxu0 %v513
    %631 = vmatprep.subr.bf16.mxu0 %v518
    %632 = vmatpush1.bf16.msra.mxu0 %v517
    %633 = vmatprep.subr.bf16.mxu0 %v522
    %634 = vmatpush1.bf16.msra.mxu0 %v521
    %635 = vmatprep.subr.bf16.mxu0 %v526
    %636 = vmatpush1.bf16.msra.mxu0 %v525
    %637 = vmatprep.subr.bf16.mxu0 %v530
    %638 = vmatpush1.bf16.msra.mxu0 %v529
    %639 = vmatprep.subr.bf16.mxu0 %v534
    %640 = vmatpush1.bf16.msra.mxu0 %v533
    %641 = vmatprep.subr.bf16.mxu0 %v538
    %642 = vmatpush1.bf16.msra.mxu0 %v537
    %643 = vmatprep.subr.bf16.mxu0 %v542
    %644 = vmatpush1.bf16.msra.mxu0 %v541
    %645 = vmatprep.subr.bf16.mxu0 %v546
    %646 = vmatpush1.bf16.msra.mxu0 %v545
    %647 = vmatprep.subr.bf16.mxu0 %v550
    %648 = vmatpush1.bf16.msra.mxu0 %v549
    %649 = vmatprep.mubr.bf16.mxu0 %v210
    %650 = vmatmul.mubr.bf16.gmra.mrb[0].mxu0 %v209
    %v651 = vpop.f32.mrb[0].mxu0
    %v652 = vadd.f32 %v280, %v651
    %v653 = vpop.f32.mrb[0].mxu0
    %v654 = vadd.f32 %v284, %v653
    %v655 = vpop.f32.mrb[0].mxu0
    %v656 = vpop.f32.mrb[0].mxu0
    %657 = vdwg.mxu0
    %658 = vmatprep.subr.bf16.mxu0 %v492
    %659 = vmatpush1.bf16.msra.mxu0 %v491
    %660 = vmatprep.subr.bf16.mxu0 %v496
    %661 = vmatpush1.bf16.msra.mxu0 %v495
    %662 = vmatprep.subr.bf16.mxu0 %v500
    %663 = vmatpush1.bf16.msra.mxu0 %v499
    %664 = vmatprep.subr.bf16.mxu0 %v504
    %665 = vmatpush1.bf16.msra.mxu0 %v503
    %666 = vmatprep.subr.bf16.mxu0 %v508
    %667 = vmatpush1.bf16.msra.mxu0 %v507
    %668 = vmatprep.subr.bf16.mxu0 %v512
    %669 = vmatpush1.bf16.msra.mxu0 %v511
    %670 = vmatprep.subr.bf16.mxu0 %v516
    %671 = vmatpush1.bf16.msra.mxu0 %v515
    %672 = vmatprep.subr.bf16.mxu0 %v520
    %673 = vmatpush1.bf16.msra.mxu0 %v519
    %674 = vmatprep.subr.bf16.mxu0 %v524
    %675 = vmatpush1.bf16.msra.mxu0 %v523
    %676 = vmatprep.subr.bf16.mxu0 %v528
    %677 = vmatpush1.bf16.msra.mxu0 %v527
    %678 = vmatprep.subr.bf16.mxu0 %v532
    %679 = vmatpush1.bf16.msra.mxu0 %v531
    %680 = vmatprep.subr.bf16.mxu0 %v536
    %681 = vmatpush1.bf16.msra.mxu0 %v535
    %682 = vmatprep.subr.bf16.mxu0 %v540
    %683 = vmatpush1.bf16.msra.mxu0 %v539
    %684 = vmatprep.subr.bf16.mxu0 %v544
    %685 = vmatpush1.bf16.msra.mxu0 %v543
    %686 = vmatprep.subr.bf16.mxu0 %v548
    %687 = vmatpush1.bf16.msra.mxu0 %v547
    %688 = vmatprep.subr.bf16.mxu0 %v552
    %689 = vmatpush1.bf16.msra.mxu0 %v551
    %690 = vmatprep.mubr.bf16.mxu0 %v210
    %691 = vmatmul.mubr.bf16.gmra.mrb[0].mxu0 %v209
    %v692 = vpop.f32.mrb[0].mxu0
    %v693 = vadd.f32 %v288, %v692
    %v694 = vpop.f32.mrb[0].mxu0
    %v695 = vadd.f32 %v292, %v694
    %v696 = vpop.f32.mrb[0].mxu0
    %v697 = vpop.f32.mrb[0].mxu0
    %698 = vdwg.mxu0
    %vm699 = vcmp.ge.f32.partialorder %v652, 0.0
    %vm700 = vcmp.ge.f32.partialorder %v654, 0.0
    %vm701 = vcmp.ge.f32.partialorder %v693, 0.0
    %vm702 = vcmp.ge.f32.partialorder %v695, 0.0
    %v703 = vmul.f32 %v652, 0.2
    %v704 = vmul.f32 %v654, 0.2
    %v705 = vmul.f32 %v693, 0.2
    %v706 = vmul.f32 %v695, 0.2
    %v707 = vsel %vm699, %v652, %v703
    %v708 = vsel %vm700, %v654, %v704
    %v709 = vsel %vm701, %v693, %v705
    %v710 = vsel %vm702, %v695, %v706
    %v711 = vpack.c.bf16 %v707, %v707
    %v712 = vpack.c.bf16 %v708, %v708
    %v713 = vpack.c.bf16 %v709, %v709
    %v714 = vpack.c.bf16 %v710, %v710
    %v715 = vld [vmem:[#allocation8] sm:$0xf]
    %v716 = vld [vmem:[#allocation8 + $0x4] sm:$0xf]
    %v717 = vld [vmem:[#allocation8 + $0x8] sm:$0xf]
    %v718 = vld [vmem:[#allocation8 + $0xc] sm:$0xf]
    %v719 = vld [vmem:[#allocation8 + $0x10] sm:$0xf]
    %v720 = vld [vmem:[#allocation8 + $0x14] sm:$0xf]
    %v721 = vld [vmem:[#allocation8 + $0x18] sm:$0xf]
    %v722 = vld [vmem:[#allocation8 + $0x1c] sm:$0xf]
    %v723 = vld [vmem:[#allocation8 + $0x20] sm:$0xf]
    %v724 = vld [vmem:[#allocation8 + $0x24] sm:$0xf]
    %v725 = vld [vmem:[#allocation8 + $0x28] sm:$0xf]
    %v726 = vld [vmem:[#allocation8 + $0x2c] sm:$0xf]
    %v727 = vld [vmem:[#allocation8 + $0x30] sm:$0xf]
    %v728 = vld [vmem:[#allocation8 + $0x34] sm:$0xf]
    %v729 = vld [vmem:[#allocation8 + $0x38] sm:$0xf]
    %v730 = vld [vmem:[#allocation8 + $0x3c] sm:$0xf]
    %v731 = vld [vmem:[#allocation8 + $0x40] sm:$0xf]
    %v732 = vld [vmem:[#allocation8 + $0x44] sm:$0xf]
    %v733 = vld [vmem:[#allocation8 + $0x48] sm:$0xf]
    %v734 = vld [vmem:[#allocation8 + $0x4c] sm:$0xf]
    %v735 = vld [vmem:[#allocation8 + $0x50] sm:$0xf]
    %v736 = vld [vmem:[#allocation8 + $0x54] sm:$0xf]
    %v737 = vld [vmem:[#allocation8 + $0x58] sm:$0xf]
    %v738 = vld [vmem:[#allocation8 + $0x5c] sm:$0xf]
    %v739 = vld [vmem:[#allocation8 + $0x60] sm:$0xf]
    %v740 = vld [vmem:[#allocation8 + $0x64] sm:$0xf]
    %v741 = vld [vmem:[#allocation8 + $0x68] sm:$0xf]
    %v742 = vld [vmem:[#allocation8 + $0x6c] sm:$0xf]
    %v743 = vld [vmem:[#allocation8 + $0x70] sm:$0xf]
    %v744 = vld [vmem:[#allocation8 + $0x74] sm:$0xf]
    %v745 = vld [vmem:[#allocation8 + $0x78] sm:$0xf]
    %v746 = vld [vmem:[#allocation8 + $0x7c] sm:$0xf]
    %v747 = vld [vmem:[#allocation8 + $0x80] sm:$0xf]
    %v748 = vld [vmem:[#allocation8 + $0x84] sm:$0xf]
    %v749 = vld [vmem:[#allocation8 + $0x88] sm:$0xf]
    %v750 = vld [vmem:[#allocation8 + $0x8c] sm:$0xf]
    %v751 = vld [vmem:[#allocation8 + $0x90] sm:$0xf]
    %v752 = vld [vmem:[#allocation8 + $0x94] sm:$0xf]
    %v753 = vld [vmem:[#allocation8 + $0x98] sm:$0xf]
    %v754 = vld [vmem:[#allocation8 + $0x9c] sm:$0xf]
    %v755 = vld [vmem:[#allocation8 + $0xa0] sm:$0xf]
    %v756 = vld [vmem:[#allocation8 + $0xa4] sm:$0xf]
    %v757 = vld [vmem:[#allocation8 + $0xa8] sm:$0xf]
    %v758 = vld [vmem:[#allocation8 + $0xac] sm:$0xf]
    %v759 = vld [vmem:[#allocation8 + $0xb0] sm:$0xf]
    %v760 = vld [vmem:[#allocation8 + $0xb4] sm:$0xf]
    %v761 = vld [vmem:[#allocation8 + $0xb8] sm:$0xf]
    %v762 = vld [vmem:[#allocation8 + $0xbc] sm:$0xf]
    %v763 = vld [vmem:[#allocation8 + $0xc0] sm:$0xf]
    %v764 = vld [vmem:[#allocation8 + $0xc4] sm:$0xf]
    %v765 = vld [vmem:[#allocation8 + $0xc8] sm:$0xf]
    %v766 = vld [vmem:[#allocation8 + $0xcc] sm:$0xf]
    %v767 = vld [vmem:[#allocation8 + $0xd0] sm:$0xf]
    %v768 = vld [vmem:[#allocation8 + $0xd4] sm:$0xf]
    %v769 = vld [vmem:[#allocation8 + $0xd8] sm:$0xf]
    %v770 = vld [vmem:[#allocation8 + $0xdc] sm:$0xf]
    %v771 = vld [vmem:[#allocation8 + $0xe0] sm:$0xf]
    %v772 = vld [vmem:[#allocation8 + $0xe4] sm:$0xf]
    %v773 = vld [vmem:[#allocation8 + $0xe8] sm:$0xf]
    %v774 = vld [vmem:[#allocation8 + $0xec] sm:$0xf]
    %v775 = vld [vmem:[#allocation8 + $0xf0] sm:$0xf]
    %v776 = vld [vmem:[#allocation8 + $0xf4] sm:$0xf]
    %v777 = vld [vmem:[#allocation8 + $0xf8] sm:$0xf]
    %v778 = vld [vmem:[#allocation8 + $0xfc] sm:$0xf]
    %v779 = vld [vmem:[%s6] sm:$0x1]
    %v781 = vlaneseq
    %v782 = vshrl.u32 %v781, 7
    %v783 = vsub.s32 0, %v782
    %v784 = vrot.slane %v779, %v783
    %v850 = vunpack.c.l.b16 %v715
    %v851 = vunpack.c.l.b16 %v716
    %v852 = vunpack.c.l.b16 %v717
    %v853 = vunpack.c.l.b16 %v718
    %v854 = vunpack.c.l.b16 %v719
    %v855 = vunpack.c.l.b16 %v720
    %v856 = vunpack.c.l.b16 %v721
    %v857 = vunpack.c.l.b16 %v722
    %v858 = vunpack.c.l.b16 %v723
    %v859 = vunpack.c.l.b16 %v724
    %v860 = vunpack.c.l.b16 %v725
    %v861 = vunpack.c.l.b16 %v726
    %v862 = vunpack.c.l.b16 %v727
    %v863 = vunpack.c.l.b16 %v728
    %v864 = vunpack.c.l.b16 %v729
    %v865 = vunpack.c.l.b16 %v730
    %v866 = vunpack.c.l.b16 %v731
    %v867 = vunpack.c.l.b16 %v732
    %v868 = vunpack.c.l.b16 %v733
    %v869 = vunpack.c.l.b16 %v734
    %v870 = vunpack.c.l.b16 %v735
    %v871 = vunpack.c.l.b16 %v736
    %v872 = vunpack.c.l.b16 %v737
    %v873 = vunpack.c.l.b16 %v738
    %v874 = vunpack.c.l.b16 %v739
    %v875 = vunpack.c.l.b16 %v740
    %v876 = vunpack.c.l.b16 %v741
    %v877 = vunpack.c.l.b16 %v742
    %v878 = vunpack.c.l.b16 %v743
    %v879 = vunpack.c.l.b16 %v744
    %v880 = vunpack.c.l.b16 %v745
    %v881 = vunpack.c.l.b16 %v746
    %v882 = vunpack.c.l.b16 %v747
    %v883 = vunpack.c.l.b16 %v748
    %v884 = vunpack.c.l.b16 %v749
    %v885 = vunpack.c.l.b16 %v750
    %v886 = vunpack.c.l.b16 %v751
    %v887 = vunpack.c.l.b16 %v752
    %v888 = vunpack.c.l.b16 %v753
    %v889 = vunpack.c.l.b16 %v754
    %v890 = vunpack.c.l.b16 %v755
    %v891 = vunpack.c.l.b16 %v756
    %v892 = vunpack.c.l.b16 %v757
    %v893 = vunpack.c.l.b16 %v758
    %v894 = vunpack.c.l.b16 %v759
    %v895 = vunpack.c.l.b16 %v760
    %v896 = vunpack.c.l.b16 %v761
    %v897 = vunpack.c.l.b16 %v762
    %v898 = vunpack.c.l.b16 %v763
    %v899 = vunpack.c.l.b16 %v764
    %v900 = vunpack.c.l.b16 %v765
    %v901 = vunpack.c.l.b16 %v766
    %v902 = vunpack.c.l.b16 %v767
    %v903 = vunpack.c.l.b16 %v768
    %v904 = vunpack.c.l.b16 %v769
    %v905 = vunpack.c.l.b16 %v770
    %v906 = vunpack.c.l.b16 %v771
    %v907 = vunpack.c.l.b16 %v772
    %v908 = vunpack.c.l.b16 %v773
    %v909 = vunpack.c.l.b16 %v774
    %v910 = vunpack.c.l.b16 %v775
    %v911 = vunpack.c.l.b16 %v776
    %v912 = vunpack.c.l.b16 %v777
    %v913 = vunpack.c.l.b16 %v778
    %v914 = vpack.c.b16 %v851, %v850
    %v915 = vpack.c.b16 %v853, %v852
    %v916 = vpack.c.b16 %v855, %v854
    %v917 = vpack.c.b16 %v857, %v856
    %v918 = vpack.c.b16 %v859, %v858
    %v919 = vpack.c.b16 %v861, %v860
    %v920 = vpack.c.b16 %v863, %v862
    %v921 = vpack.c.b16 %v865, %v864
    %v922 = vpack.c.b16 %v867, %v866
    %v923 = vpack.c.b16 %v869, %v868
    %v924 = vpack.c.b16 %v871, %v870
    %v925 = vpack.c.b16 %v873, %v872
    %v926 = vpack.c.b16 %v875, %v874
    %v927 = vpack.c.b16 %v877, %v876
    %v928 = vpack.c.b16 %v879, %v878
    %v929 = vpack.c.b16 %v881, %v880
    %v930 = vpack.c.b16 %v883, %v882
    %v931 = vpack.c.b16 %v885, %v884
    %v932 = vpack.c.b16 %v887, %v886
    %v933 = vpack.c.b16 %v889, %v888
    %v934 = vpack.c.b16 %v891, %v890
    %v935 = vpack.c.b16 %v893, %v892
    %v936 = vpack.c.b16 %v895, %v894
    %v937 = vpack.c.b16 %v897, %v896
    %v938 = vpack.c.b16 %v899, %v898
    %v939 = vpack.c.b16 %v901, %v900
    %v940 = vpack.c.b16 %v903, %v902
    %v941 = vpack.c.b16 %v905, %v904
    %v942 = vpack.c.b16 %v907, %v906
    %v943 = vpack.c.b16 %v909, %v908
    %v944 = vpack.c.b16 %v911, %v910
    %v945 = vpack.c.b16 %v913, %v912
    %978 = vmatprep.subr.bf16.mxu0 0
    %979 = vmatpush1.bf16.msra.mxu0 %v914
    %980 = vmatprep.subr.bf16.mxu0 0
    %981 = vmatpush1.bf16.msra.mxu0 %v915
    %982 = vmatprep.subr.bf16.mxu0 0
    %983 = vmatpush1.bf16.msra.mxu0 %v916
    %984 = vmatprep.subr.bf16.mxu0 0
    %985 = vmatpush1.bf16.msra.mxu0 %v917
    %986 = vmatprep.subr.bf16.mxu0 0
    %987 = vmatpush1.bf16.msra.mxu0 %v918
    %988 = vmatprep.subr.bf16.mxu0 0
    %989 = vmatpush1.bf16.msra.mxu0 %v919
    %990 = vmatprep.subr.bf16.mxu0 0
    %991 = vmatpush1.bf16.msra.mxu0 %v920
    %992 = vmatprep.subr.bf16.mxu0 0
    %993 = vmatpush1.bf16.msra.mxu0 %v921
    %994 = vmatprep.subr.bf16.mxu0 0
    %995 = vmatpush1.bf16.msra.mxu0 %v922
    %996 = vmatprep.subr.bf16.mxu0 0
    %997 = vmatpush1.bf16.msra.mxu0 %v923
    %998 = vmatprep.subr.bf16.mxu0 0
    %999 = vmatpush1.bf16.msra.mxu0 %v924
    %1000 = vmatprep.subr.bf16.mxu0 0
    %1001 = vmatpush1.bf16.msra.mxu0 %v925
    %1002 = vmatprep.subr.bf16.mxu0 0
    %1003 = vmatpush1.bf16.msra.mxu0 %v926
    %1004 = vmatprep.subr.bf16.mxu0 0
    %1005 = vmatpush1.bf16.msra.mxu0 %v927
    %1006 = vmatprep.subr.bf16.mxu0 0
    %1007 = vmatpush1.bf16.msra.mxu0 %v928
    %1008 = vmatprep.subr.bf16.mxu0 0
    %1009 = vmatpush1.bf16.msra.mxu0 %v929
    %1010 = vmatprep.mubr.bf16.mxu0 %v712
    %1011 = vmatmul.mubr.bf16.gmra.mrb[0].mxu0 %v711
    %v1012 = vpop.f32.mrb[0].mxu0
    %v1013 = vadd.f32 %v784, %v1012
    %v1014 = vpop.f32.mrb[0].mxu0
    %v1015 = vpop.f32.mrb[0].mxu0
    %v1016 = vpop.f32.mrb[0].mxu0
    %1017 = vdwg.mxu0
    %1018 = vmatprep.subr.bf16.mxu0 0
    %1019 = vmatpush1.bf16.msra.mxu0 %v930
    %1020 = vmatprep.subr.bf16.mxu0 0
    %1021 = vmatpush1.bf16.msra.mxu0 %v931
    %1022 = vmatprep.subr.bf16.mxu0 0
    %1023 = vmatpush1.bf16.msra.mxu0 %v932
    %1024 = vmatprep.subr.bf16.mxu0 0
    %1025 = vmatpush1.bf16.msra.mxu0 %v933
    %1026 = vmatprep.subr.bf16.mxu0 0
    %1027 = vmatpush1.bf16.msra.mxu0 %v934
    %1028 = vmatprep.subr.bf16.mxu0 0
    %1029 = vmatpush1.bf16.msra.mxu0 %v935
    %1030 = vmatprep.subr.bf16.mxu0 0
    %1031 = vmatpush1.bf16.msra.mxu0 %v936
    %1032 = vmatprep.subr.bf16.mxu0 0
    %1033 = vmatpush1.bf16.msra.mxu0 %v937
    %1034 = vmatprep.subr.bf16.mxu0 0
    %1035 = vmatpush1.bf16.msra.mxu0 %v938
    %1036 = vmatprep.subr.bf16.mxu0 0
    %1037 = vmatpush1.bf16.msra.mxu0 %v939
    %1038 = vmatprep.subr.bf16.mxu0 0
    %1039 = vmatpush1.bf16.msra.mxu0 %v940
    %1040 = vmatprep.subr.bf16.mxu0 0
    %1041 = vmatpush1.bf16.msra.mxu0 %v941
    %1042 = vmatprep.subr.bf16.mxu0 0
    %1043 = vmatpush1.bf16.msra.mxu0 %v942
    %1044 = vmatprep.subr.bf16.mxu0 0
    %1045 = vmatpush1.bf16.msra.mxu0 %v943
    %1046 = vmatprep.subr.bf16.mxu0 0
    %1047 = vmatpush1.bf16.msra.mxu0 %v944
    %1048 = vmatprep.subr.bf16.mxu0 0
    %1049 = vmatpush1.bf16.msra.mxu0 %v945
    %1050 = vmatprep.mubr.bf16.mxu0 %v714
    %1051 = vmatmul.mubr.bf16.gmra.mrb[0].mxu0 %v713
    %v1052 = vpop.f32.mrb[0].mxu0
    %v1053 = vadd.f32 %v1013, %v1052
    %v1054 = vpop.f32.mrb[0].mxu0
    %v1055 = vpop.f32.mrb[0].mxu0
    %v1056 = vpop.f32.mrb[0].mxu0
    %1057 = vdwg.mxu0
    %vm1058 = vcmp.ge.f32.partialorder %v1053, 0.0
    %v1059 = vmul.f32 %v1053, 0.2
    %v1060 = vsel %vm1058, %v1053, %v1059
    %v1061 = vpack.c.bf16 %v1060, %v1060
    %v1062 = vld [vmem:[#allocation10] sm:$0xf]
    %v1063 = vld [vmem:[#allocation10 + $0x4] sm:$0xf]
    %v1064 = vld [vmem:[#allocation10 + $0x8] sm:$0xf]
    %v1065 = vld [vmem:[#allocation10 + $0xc] sm:$0xf]
    %v1066 = vld [vmem:[#allocation10 + $0x10] sm:$0xf]
    %v1067 = vld [vmem:[#allocation10 + $0x14] sm:$0xf]
    %v1068 = vld [vmem:[#allocation10 + $0x18] sm:$0xf]
    %v1069 = vld [vmem:[#allocation10 + $0x1c] sm:$0xf]
    %v1070 = vld [vmem:[#allocation10 + $0x20] sm:$0xf]
    %v1071 = vld [vmem:[#allocation10 + $0x24] sm:$0xf]
    %v1072 = vld [vmem:[#allocation10 + $0x28] sm:$0xf]
    %v1073 = vld [vmem:[#allocation10 + $0x2c] sm:$0xf]
    %v1074 = vld [vmem:[#allocation10 + $0x30] sm:$0xf]
    %v1075 = vld [vmem:[#allocation10 + $0x34] sm:$0xf]
    %v1076 = vld [vmem:[#allocation10 + $0x38] sm:$0xf]
    %v1077 = vld [vmem:[#allocation10 + $0x3c] sm:$0xf]
    %v1078 = vld [vmem:[%s8] sm:$0x1]
    %v1080 = vlaneseq
    %v1081 = vshrl.u32 %v1080, 7
    %v1082 = vsub.s32 0, %v1081
    %v1083 = vrot.slane %v1078, %v1082
    %v1101 = vunpack.c.l.b16 %v1062
    %v1102 = vunpack.c.l.b16 %v1063
    %v1103 = vunpack.c.l.b16 %v1064
    %v1104 = vunpack.c.l.b16 %v1065
    %v1105 = vunpack.c.l.b16 %v1066
    %v1106 = vunpack.c.l.b16 %v1067
    %v1107 = vunpack.c.l.b16 %v1068
    %v1108 = vunpack.c.l.b16 %v1069
    %v1109 = vunpack.c.l.b16 %v1070
    %v1110 = vunpack.c.l.b16 %v1071
    %v1111 = vunpack.c.l.b16 %v1072
    %v1112 = vunpack.c.l.b16 %v1073
    %v1113 = vunpack.c.l.b16 %v1074
    %v1114 = vunpack.c.l.b16 %v1075
    %v1115 = vunpack.c.l.b16 %v1076
    %v1116 = vunpack.c.l.b16 %v1077
    %v1117 = vpack.c.b16 %v1102, %v1101
    %v1118 = vpack.c.b16 %v1104, %v1103
    %v1119 = vpack.c.b16 %v1106, %v1105
    %v1120 = vpack.c.b16 %v1108, %v1107
    %v1121 = vpack.c.b16 %v1110, %v1109
    %v1122 = vpack.c.b16 %v1112, %v1111
    %v1123 = vpack.c.b16 %v1114, %v1113
    %v1124 = vpack.c.b16 %v1116, %v1115
    %1133 = vmatprep.subr.bf16.mxu0 0
    %1134 = vmatpush1.bf16.msra.mxu0 %v1117
    %1135 = vmatprep.subr.bf16.mxu0 0
    %1136 = vmatpush1.bf16.msra.mxu0 %v1118
    %1137 = vmatprep.subr.bf16.mxu0 0
    %1138 = vmatpush1.bf16.msra.mxu0 %v1119
    %1139 = vmatprep.subr.bf16.mxu0 0
    %1140 = vmatpush1.bf16.msra.mxu0 %v1120
    %1141 = vmatprep.subr.bf16.mxu0 0
    %1142 = vmatpush1.bf16.msra.mxu0 %v1121
    %1143 = vmatprep.subr.bf16.mxu0 0
    %1144 = vmatpush1.bf16.msra.mxu0 %v1122
    %1145 = vmatprep.subr.bf16.mxu0 0
    %1146 = vmatpush1.bf16.msra.mxu0 %v1123
    %1147 = vmatprep.subr.bf16.mxu0 0
    %1148 = vmatpush1.bf16.msra.mxu0 %v1124
    %1149 = vmatprep.subr.bf16.mxu0 0
    %1150 = vmatpush1.bf16.msra.mxu0 0
    %1151 = vmatprep.subr.bf16.mxu0 0
    %1152 = vmatpush1.bf16.msra.mxu0 0
    %1153 = vmatprep.subr.bf16.mxu0 0
    %1154 = vmatpush1.bf16.msra.mxu0 0
    %1155 = vmatprep.subr.bf16.mxu0 0
    %1156 = vmatpush1.bf16.msra.mxu0 0
    %1157 = vmatprep.subr.bf16.mxu0 0
    %1158 = vmatpush1.bf16.msra.mxu0 0
    %1159 = vmatprep.subr.bf16.mxu0 0
    %1160 = vmatpush1.bf16.msra.mxu0 0
    %1161 = vmatprep.subr.bf16.mxu0 0
    %1162 = vmatpush1.bf16.msra.mxu0 0
    %1163 = vmatprep.subr.bf16.mxu0 0
    %1164 = vmatpush1.bf16.msra.mxu0 0
    %1165 = vmatprep.mubr.bf16.mxu0 0
    %1166 = vmatmul.mubr.bf16.gmra.mrb[0].mxu0 %v1061
    %v1167 = vpop.f32.mrb[0].mxu0
    %v1168 = vadd.f32 %v1083, %v1167
    %v1169 = vpop.f32.mrb[0].mxu0
    %v1170 = vpop.f32.mrb[0].mxu0
    %v1171 = vpop.f32.mrb[0].mxu0
    %1172 = vdwg.mxu0
    %vm1173 = vcmp.ge.f32.partialorder %v1168, 0.0
    %v1174 = vmul.f32 %v1168, 0.2
    %v1175 = vsel %vm1173, %v1168, %v1174
    %v1176 = vpack.c.bf16 %v1175, %v1175
    %v1177 = vld [vmem:[#allocation11] sm:$0xf]
    %v1178 = vld [vmem:[#allocation11 + $0x4] sm:$0xf]
    %v1179 = vld [vmem:[#allocation11 + $0x8] sm:$0xf]
    %v1180 = vld [vmem:[#allocation11 + $0xc] sm:$0xf]
    %v1181 = vld [vmem:[#allocation11 + $0x10] sm:$0xf]
    %v1182 = vld [vmem:[#allocation11 + $0x14] sm:$0xf]
    %v1183 = vld [vmem:[#allocation11 + $0x18] sm:$0xf]
    %v1184 = vld [vmem:[#allocation11 + $0x1c] sm:$0xf]
    %v1185 = vld [vmem:[#allocation11 + $0x20] sm:$0xf]
    %v1186 = vld [vmem:[#allocation11 + $0x24] sm:$0xf]
    %v1187 = vld [vmem:[#allocation11 + $0x28] sm:$0xf]
    %v1188 = vld [vmem:[#allocation11 + $0x2c] sm:$0xf]
    %v1189 = vld [vmem:[#allocation11 + $0x30] sm:$0xf]
    %v1190 = vld [vmem:[#allocation11 + $0x34] sm:$0xf]
    %v1191 = vld [vmem:[#allocation11 + $0x38] sm:$0xf]
    %v1192 = vld [vmem:[#allocation11 + $0x3c] sm:$0xf]
    %v1193 = vld [vmem:[%s10] sm:$0x1]
    %v1195 = vlaneseq
    %v1196 = vshrl.u32 %v1195, 7
    %v1197 = vsub.s32 0, %v1196
    %v1198 = vrot.slane %v1193, %v1197
    %v1216 = vunpack.c.l.b16 %v1177
    %v1217 = vunpack.c.l.b16 %v1178
    %v1218 = vunpack.c.l.b16 %v1179
    %v1219 = vunpack.c.l.b16 %v1180
    %v1220 = vunpack.c.l.b16 %v1181
    %v1221 = vunpack.c.l.b16 %v1182
    %v1222 = vunpack.c.l.b16 %v1183
    %v1223 = vunpack.c.l.b16 %v1184
    %v1224 = vunpack.c.l.b16 %v1185
    %v1225 = vunpack.c.l.b16 %v1186
    %v1226 = vunpack.c.l.b16 %v1187
    %v1227 = vunpack.c.l.b16 %v1188
    %v1228 = vunpack.c.l.b16 %v1189
    %v1229 = vunpack.c.l.b16 %v1190
    %v1230 = vunpack.c.l.b16 %v1191
    %v1231 = vunpack.c.l.b16 %v1192
    %v1232 = vpack.c.b16 %v1217, %v1216
    %v1233 = vpack.c.b16 %v1219, %v1218
    %v1234 = vpack.c.b16 %v1221, %v1220
    %v1235 = vpack.c.b16 %v1223, %v1222
    %v1236 = vpack.c.b16 %v1225, %v1224
    %v1237 = vpack.c.b16 %v1227, %v1226
    %v1238 = vpack.c.b16 %v1229, %v1228
    %v1239 = vpack.c.b16 %v1231, %v1230
    %1248 = vmatprep.subr.bf16.mxu0 0
    %1249 = vmatpush1.bf16.msra.mxu0 %v1232
    %1250 = vmatprep.subr.bf16.mxu0 0
    %1251 = vmatpush1.bf16.msra.mxu0 %v1233
    %1252 = vmatprep.subr.bf16.mxu0 0
    %1253 = vmatpush1.bf16.msra.mxu0 %v1234
    %1254 = vmatprep.subr.bf16.mxu0 0
    %1255 = vmatpush1.bf16.msra.mxu0 %v1235
    %1256 = vmatprep.subr.bf16.mxu0 0
    %1257 = vmatpush1.bf16.msra.mxu0 %v1236
    %1258 = vmatprep.subr.bf16.mxu0 0
    %1259 = vmatpush1.bf16.msra.mxu0 %v1237
    %1260 = vmatprep.subr.bf16.mxu0 0
    %1261 = vmatpush1.bf16.msra.mxu0 %v1238
    %1262 = vmatprep.subr.bf16.mxu0 0
    %1263 = vmatpush1.bf16.msra.mxu0 %v1239
    %1264 = vmatprep.subr.bf16.mxu0 0
    %1265 = vmatpush1.bf16.msra.mxu0 0
    %1266 = vmatprep.subr.bf16.mxu0 0
    %1267 = vmatpush1.bf16.msra.mxu0 0
    %1268 = vmatprep.subr.bf16.mxu0 0
    %1269 = vmatpush1.bf16.msra.mxu0 0
    %1270 = vmatprep.subr.bf16.mxu0 0
    %1271 = vmatpush1.bf16.msra.mxu0 0
    %1272 = vmatprep.subr.bf16.mxu0 0
    %1273 = vmatpush1.bf16.msra.mxu0 0
    %1274 = vmatprep.subr.bf16.mxu0 0
    %1275 = vmatpush1.bf16.msra.mxu0 0
    %1276 = vmatprep.subr.bf16.mxu0 0
    %1277 = vmatpush1.bf16.msra.mxu0 0
    %1278 = vmatprep.subr.bf16.mxu0 0
    %1279 = vmatpush1.bf16.msra.mxu0 0
    %1280 = vmatprep.mubr.bf16.mxu0 0
    %1281 = vmatmul.mubr.bf16.gmra.mrb[0].mxu0 %v1176
    %v1282 = vpop.f32.mrb[0].mxu0
    %v1283 = vadd.f32 %v1198, %v1282
    %v1284 = vpop.f32.mrb[0].mxu0
    %v1285 = vpop.f32.mrb[0].mxu0
    %v1286 = vpop.f32.mrb[0].mxu0
    %1287 = vdwg.mxu0
    %v1288 = vlaneseq
    %v1289 = vand.u32 %v1288, 127
    %vm1290 = vcmp.lt.s32.totalorder %v1289, 2
    %v1291 = vsel %vm1290, %v1283, -1e+30
    %1292 = vmax.xlane.f32.xlu0 %v1291
    %v1293 = vpop.xlane.xlu0 %1292
    %v1294 = vsub.f32 %v1291, %v1293
    %v1295 = vmul.f32 %v1294, 1.442695
    %v1296 = vpow.pop %v1295
    %1297 = vadd.xlane.f32.xlu0 %v1296
    %v1298 = vpop.xlane.xlu0 %1297
    %v1299 = vlog2.pop %v1298
    %v1300 = vmul.f32 %v1299, 0.6931472
    %v1301 = vsub.f32 %v1294, %v1300
    %v1302 = vpack.c.bf16 %v1301, %v1301
    %1303 = vst [vmem:[#allocation13] sm:$0xf] %v1302
    // Predicated region
    $region70: #{tpu_custom_call.1} parent=1 // pred_check
      _
    $region71: #{tpu_custom_call.1} parent=1 // pred_check_branch
      %1305 = sbr.rel (0) target = $region73
    $region72: #{tpu_custom_call.1} parent=1 // pred_region
      %s1307 = ssub.s32 64, 64
      %1308 = vsyncadd [#allocation4], %s1307
      %s1310 = sshll.u32 [#allocation13], 4
      %s1311 = int_to_ptr.vmem [resolvable:$true] %s1310
      %1313 = dma.vmem_to_hbm [thread:$0]  %s1311, 64, %s11, [#allocation4]
    $region73: #{tpu_custom_call.1} parent=1 // pred_fallthru
      _
    // Predicated region
    $region74: #{tpu_custom_call.1} parent=1 // pred_check
      _
    $region75: #{tpu_custom_call.1} parent=1 // pred_check_branch
      %1315 = sbr.rel (0) target = $region77
    $region76: #{tpu_custom_call.1} parent=1 // pred_region
      %1316 = dma.done [#allocation4], 64
    $region77: #{tpu_custom_call.1} parent=1 // pred_fallthru
      _
    %1317 = vsyncpa [#allocation3], 1
    %1318 = vsyncpa [#allocation6], 1
    %1319 = vsyncpa [#allocation9], 1
    %1320 = vsyncpa [#allocation12], 1
    %1321 = vsyncpa [#allocation4], 1

</llo_original>
